<compile_context>
chip_gen: v5e
topology: v5e:2x2
jax: 0.10.0
libtpu: 0.0.40
codegen_flags: <defaults>
</compile_context>

<pallas_src>
from functools import partial

import jax
import jax.numpy as jnp
from jax.experimental import pallas as pl
from jax.experimental.pallas import tpu as pltpu

# ---------------- "Config" (small, deterministic, consistent with the module) -----
VOCAB_SIZE = 16          # len(utils.create_vocabulary(Config.window_size))
EMBEDDING_SIZE = 8       # Config.embedding_size
SENT_SIZE = 4            # sent_size
EMBEDS_SIZE = EMBEDDING_SIZE * SENT_SIZE   # 32
HIDDEN = 32              # Config.hidden_layer_size
NUM_LAYERS = 2           # Config.num_layers
BATCH = 2

GATES = 3 * HIDDEN       # packed [i, g, o]; f-gate dead for seq_len==1 / zero c0

# Row offsets inside the single packed (SLAB_ROWS, GATES) weight slab.
TBL_ROW   = 0                              # rows 0..63 : layer-0 gate tables (s*V + v)
W1T_ROW   = SENT_SIZE * VOCAB_SIZE         # rows 64..95 : W_ih1^T  (H, 3H), g cols x2
WFC1_ROW  = W1T_ROW + HIDDEN               # rows 96..127: fc1 W^T  (H, H) in lanes 0:H
B1_ROW    = WFC1_ROW + HIDDEN              # row 128     : b_ih1 + b_hh1 (igo, g x2)
BFC1_ROW  = B1_ROW + 1                     # row 129     : fc1 bias  (lanes 0:H)
WFC2_ROW  = BFC1_ROW + 1                   # row 130     : fc2 weight row (lanes 0:H)
BFC2_ROW  = WFC2_ROW + 1                   # row 131     : fc2 bias (lane 0)
SLAB_ROWS = 136                            # 132 padded up to a multiple of 8 sublanes


# ---------------- Pallas kernel ----------------------------------------------------
def lstm_net_kernel(idx_ref,          # SMEM (batch*sent,) int32   flattened token ids
                    slab_ref,         # VMEM (SLAB_ROWS, 3H)       packed weights/tables
                    out_ref,          # VMEM (batch, 1)
                    g0_scr,           # VMEM scratch (batch, 3H)
                    *, batch, sent, vocab, hidden):
    H, V = hidden, vocab

    # ---- layer-0 gates straight from the precomputed gate table -----------------
    # g0[b] = b0 + sum_s T_s[idx[b, s]]   (T_s and b0 are baked into slab rows 0..S*V-1)
    for b in range(batch):
        acc = slab_ref[pl.ds(idx_ref[b * sent], 1), :]                   # s = 0 row (+b0)
        for s in range(1, sent):
            acc = acc + slab_ref[pl.ds(s * V + idx_ref[b * sent + s], 1), :]
        g0_scr[b:b + 1, :] = acc
    g0 = g0_scr[...]                                                     # (B, 3H)

    def gate_act(g):
        # gates packed [i, 2*g, o]; f-gate dropped (seq_len==1, c0==0 => c = i*tanh(g)).
        # One sigmoid over the whole block; tanh(x) = 2*sigmoid(2x) - 1 for the g gate.
        sg = jax.nn.sigmoid(g)
        i = sg[:, 0:H]
        tg = 2.0 * sg[:, H:2 * H] - 1.0
        o = sg[:, 2 * H:3 * H]
        return o * jnp.tanh(i * tg)

    h = gate_act(g0)                                                     # layer-0 output

    # ---- layer-1 LSTM cell (h_prev = 0 => W_hh contributes nothing) -------------
    w1t = slab_ref[W1T_ROW:W1T_ROW + H, :]                               # (H, 3H)
    b1 = slab_ref[B1_ROW:B1_ROW + 1, :]                                  # (1, 3H)
    h = gate_act(jnp.dot(h, w1t, preferred_element_type=jnp.float32) + b1)

    # ---- fc1 -> dropout (eval-mode identity) -> relu ----------------------------
    wfc1t = slab_ref[WFC1_ROW:WFC1_ROW + H, 0:H]                         # (H, H)
    bfc1 = slab_ref[BFC1_ROW:BFC1_ROW + 1, 0:H]                          # (1, H)
    act1 = jnp.maximum(
        jnp.dot(h, wfc1t, preferred_element_type=jnp.float32) + bfc1, 0.0)

    # ---- fc2 -> dropout (identity) -> sigmoid: VPU multiply + lane reduction ----
    wfc2 = slab_ref[WFC2_ROW:WFC2_ROW + 1, 0:H]                          # (1, H)
    bfc2 = slab_ref[BFC2_ROW:BFC2_ROW + 1, 0:1]                          # (1, 1)
    out_ref[...] = jax.nn.sigmoid(
        jnp.sum(act1 * wfc2, axis=-1, keepdims=True) + bfc2)


# ---------------- One-time parameter preparation (off the hot path) ----------------
def prepare_params(params):
    H, V, E, S = HIDDEN, VOCAB_SIZE, EMBEDDING_SIZE, SENT_SIZE
    G = 3 * H

    def igo_rows(w):       # (4H, in), PyTorch packing i,f,g,o -> keep i,g,o; g rows x2
        return jnp.concatenate([w[0:H], 2.0 * w[2 * H:3 * H], w[3 * H:4 * H]], axis=0)

    def igo_bias(bi, bh):
        b = bi + bh
        return jnp.concatenate([b[0:H], 2.0 * b[2 * H:3 * H], b[3 * H:4 * H]], axis=0)

    emb = params["embedding"].astype(jnp.float32)                        # (V, E)
    w0 = igo_rows(params["w_ih0"])                                       # (3H, S*E)
    b0 = igo_bias(params["b_ih0"], params["b_hh0"])                      # (3H,)

    # Per-position gate tables: tbl[s, v, :] = emb[v] @ w0[:, s*E:(s+1)*E]^T
    w0_blocks = w0.reshape(G, S, E)                                      # [g, s, e]
    tbl = jnp.einsum("ve,gse->svg", emb, w0_blocks)                      # (S, V, 3H)
    tbl = tbl.at[0].add(b0[None, :])                                     # fold b0 into s==0
    tbl = tbl.reshape(S * V, G)

    w1t = igo_rows(params["w_ih1"]).T                                    # (H, 3H)
    b1 = igo_bias(params["b_ih1"], params["b_hh1"])                      # (3H,)
    wfc1t = params["w_fc1"].T                                            # (H, H)

    slab = jnp.zeros((SLAB_ROWS, G), jnp.float32)
    slab = slab.at[TBL_ROW:TBL_ROW + S * V, :].set(tbl)
    slab = slab.at[W1T_ROW:W1T_ROW + H, :].set(w1t)
    slab = slab.at[WFC1_ROW:WFC1_ROW + H, 0:H].set(wfc1t)
    slab = slab.at[B1_ROW, :].set(b1)
    slab = slab.at[BFC1_ROW, 0:H].set(params["b_fc1"])
    slab = slab.at[WFC2_ROW, 0:H].set(params["w_fc2"][0])
    slab = slab.at[BFC2_ROW, 0].set(params["b_fc2"][0])
    return {"slab": slab}


# ---------------- Wrapper: one pallas_call, two operands ---------------------------
def lstm_net_forward(inputs, prepped):
    B = inputs.shape[0]
    idx = inputs.reshape(-1).astype(jnp.int32)                           # (B*sent,), b-major
    # NOTE: out-of-range token ids would read adjacent VMEM unchecked; validate upstream.

    kern = partial(lstm_net_kernel, batch=B, sent=SENT_SIZE,
                   vocab=VOCAB_SIZE, hidden=HIDDEN)
    return pl.pallas_call(
        kern,
        out_shape=jax.ShapeDtypeStruct((B, 1), jnp.float32),
        in_specs=[pl.BlockSpec(memory_space=pltpu.MemorySpace.SMEM),
                  pl.BlockSpec(memory_space=pltpu.MemorySpace.VMEM)],
        out_specs=pl.BlockSpec(memory_space=pltpu.MemorySpace.VMEM),
        scratch_shapes=[pltpu.VMEM((B, GATES), jnp.float32)],
    )(idx, prepped["slab"])


# ---------------- Deterministic parameter initialization ---------------------------
def init_params(key):
    ks = jax.random.split(key, 12)
    u = lambda k, shape, bound: jax.random.uniform(k, shape, jnp.float32, -bound, bound)
    bnd = 1.0 / (HIDDEN ** 0.5)
    return {
        "embedding": jax.random.normal(ks[0], (VOCAB_SIZE, EMBEDDING_SIZE), jnp.float32),
        # LSTM layer 0
        "w_ih0": u(ks[1], (4 * HIDDEN, EMBEDS_SIZE), bnd),
        "b_ih0": u(ks[2], (4 * HIDDEN,), bnd),
        "b_hh0": u(ks[3], (4 * HIDDEN,), bnd),
        # LSTM layer 1
        "w_ih1": u(ks[4], (4 * HIDDEN, HIDDEN), bnd),
        "b_ih1": u(ks[5], (4 * HIDDEN,), bnd),
        "b_hh1": u(ks[6], (4 * HIDDEN,), bnd),
        # fc1 / fc2
        "w_fc1": u(ks[7], (HIDDEN, HIDDEN), bnd),
        "b_fc1": u(ks[8], (HIDDEN,), bnd),
        "w_fc2": u(ks[9], (1, HIDDEN), bnd),
        "b_fc2": u(ks[10], (1,), bnd),
        # NOTE: W_hh weights omitted — with seq_len == 1 and zero initial (h0, c0)
        # they contribute exactly zero to the forward pass (valid ONLY in this regime).
    }


# ---------------- Pure-JAX reference (for correctness sanity check) ----------------
def reference_forward(inputs, params):
    emb = jnp.take(params["embedding"], inputs, axis=0)
    x = emb.reshape(-1, EMBEDS_SIZE).astype(jnp.float32)

    def cell(inp, w, bi, bh):
        g = inp @ w.T + bi + bh                                # PyTorch gate order i,f,g,o
        H = HIDDEN
        i = jax.nn.sigmoid(g[:, :H])
        gg = jnp.tanh(g[:, 2 * H:3 * H])
        o = jax.nn.sigmoid(g[:, 3 * H:])
        return o * jnp.tanh(i * gg)                            # c0 = 0 -> f-gate unused

    h = cell(x, params["w_ih0"], params["b_ih0"], params["b_hh0"])
    h = cell(h, params["w_ih1"], params["b_ih1"], params["b_hh1"])
    l1 = jnp.maximum(h @ params["w_fc1"].T + params["b_fc1"], 0.0)
    l2 = l1 @ params["w_fc2"].T + params["b_fc2"]
    return jax.nn.sigmoid(l2)


if __name__ == "__main__":
    key = jax.random.PRNGKey(0)
    k_inp, k_par = jax.random.split(key)
    params = init_params(k_par)
    # TODO(synk): nn.Dropout is treated as eval-mode identity (no stochastic mask).
    inputs = jax.random.randint(k_inp, (BATCH, SENT_SIZE), 0, VOCAB_SIZE, dtype=jnp.int32)

    prepped = prepare_params(params)          # one-time weight prep (outside hot path)
    out = lstm_net_forward(inputs, prepped)
    out = jax.block_until_ready(out)

    ref = reference_forward(inputs, params)
    assert out.shape == (BATCH, 1)
    assert jnp.allclose(out, ref, atol=1e-5, rtol=1e-5)
    print("KERNEL_OK")
</pallas_src>

<mosaic_0001>
module attributes {stable_mosaic.version = 11 : i64} {
  func.func @lstm_net_kernel(%arg0: memref<8xi32, #tpu.memory_space<smem>>, %arg1: memref<136x96xf32, #tpu.memory_space<vmem>>, %arg2: memref<2x1xf32, #tpu.memory_space<vmem>>, %arg3: memref<2x96xf32, #tpu.memory_space<vmem>>) attributes {dimension_semantics = [], scalar_prefetch = 0 : i64, scratch_operands = 1 : i64, tpu.core_type = #tpu.core_type<tc>} {
    %c0 = arith.constant 0 : index
    %0 = memref.load %arg0[%c0] : memref<8xi32, #tpu.memory_space<smem>>
    %1 = arith.index_cast %0 : i32 to index
    %c0_0 = arith.constant 0 : index
    %2 = vector.load %arg1[%1, %c0_0] : memref<136x96xf32, #tpu.memory_space<vmem>>, vector<1x96xf32>
    %c1 = arith.constant 1 : index
    %3 = memref.load %arg0[%c1] : memref<8xi32, #tpu.memory_space<smem>>
    %c16_i32 = arith.constant 16 : i32
    %4 = arith.addi %c16_i32, %3 : i32
    %5 = arith.index_cast %4 : i32 to index
    %c0_1 = arith.constant 0 : index
    %6 = vector.load %arg1[%5, %c0_1] : memref<136x96xf32, #tpu.memory_space<vmem>>, vector<1x96xf32>
    %7 = arith.addf %2, %6 : vector<1x96xf32>
    %c2 = arith.constant 2 : index
    %8 = memref.load %arg0[%c2] : memref<8xi32, #tpu.memory_space<smem>>
    %c32_i32 = arith.constant 32 : i32
    %9 = arith.addi %c32_i32, %8 : i32
    %10 = arith.index_cast %9 : i32 to index
    %c0_2 = arith.constant 0 : index
    %11 = vector.load %arg1[%10, %c0_2] : memref<136x96xf32, #tpu.memory_space<vmem>>, vector<1x96xf32>
    %12 = arith.addf %7, %11 : vector<1x96xf32>
    %c3 = arith.constant 3 : index
    %13 = memref.load %arg0[%c3] : memref<8xi32, #tpu.memory_space<smem>>
    %c48_i32 = arith.constant 48 : i32
    %14 = arith.addi %c48_i32, %13 : i32
    %15 = arith.index_cast %14 : i32 to index
    %c0_3 = arith.constant 0 : index
    %16 = vector.load %arg1[%15, %c0_3] : memref<136x96xf32, #tpu.memory_space<vmem>>, vector<1x96xf32>
    %17 = arith.addf %12, %16 : vector<1x96xf32>
    %c0_4 = arith.constant 0 : index
    %c0_5 = arith.constant 0 : index
    %18 = vector.load %arg3[%c0_4, %c0_5] : memref<2x96xf32, #tpu.memory_space<vmem>>, vector<1x96xf32>
    tpu.vector_store %arg3[%c0_4, %c0_5], %17 {strides = array<i32>} : memref<2x96xf32, #tpu.memory_space<vmem>>, vector<1x96xf32>,
    %c4 = arith.constant 4 : index
    %19 = memref.load %arg0[%c4] : memref<8xi32, #tpu.memory_space<smem>>
    %20 = arith.index_cast %19 : i32 to index
    %c0_6 = arith.constant 0 : index
    %21 = vector.load %arg1[%20, %c0_6] : memref<136x96xf32, #tpu.memory_space<vmem>>, vector<1x96xf32>
    %c5 = arith.constant 5 : index
    %22 = memref.load %arg0[%c5] : memref<8xi32, #tpu.memory_space<smem>>
    %c16_i32_7 = arith.constant 16 : i32
    %23 = arith.addi %c16_i32_7, %22 : i32
    %24 = arith.index_cast %23 : i32 to index
    %c0_8 = arith.constant 0 : index
    %25 = vector.load %arg1[%24, %c0_8] : memref<136x96xf32, #tpu.memory_space<vmem>>, vector<1x96xf32>
    %26 = arith.addf %21, %25 : vector<1x96xf32>
    %c6 = arith.constant 6 : index
    %27 = memref.load %arg0[%c6] : memref<8xi32, #tpu.memory_space<smem>>
    %c32_i32_9 = arith.constant 32 : i32
    %28 = arith.addi %c32_i32_9, %27 : i32
    %29 = arith.index_cast %28 : i32 to index
    %c0_10 = arith.constant 0 : index
    %30 = vector.load %arg1[%29, %c0_10] : memref<136x96xf32, #tpu.memory_space<vmem>>, vector<1x96xf32>
    %31 = arith.addf %26, %30 : vector<1x96xf32>
    %c7 = arith.constant 7 : index
    %32 = memref.load %arg0[%c7] : memref<8xi32, #tpu.memory_space<smem>>
    %c48_i32_11 = arith.constant 48 : i32
    %33 = arith.addi %c48_i32_11, %32 : i32
    %34 = arith.index_cast %33 : i32 to index
    %c0_12 = arith.constant 0 : index
    %35 = vector.load %arg1[%34, %c0_12] : memref<136x96xf32, #tpu.memory_space<vmem>>, vector<1x96xf32>
    %36 = arith.addf %31, %35 : vector<1x96xf32>
    %c1_13 = arith.constant 1 : index
    %c0_14 = arith.constant 0 : index
    %37 = vector.load %arg3[%c1_13, %c0_14] : memref<2x96xf32, #tpu.memory_space<vmem>>, vector<1x96xf32>
    tpu.vector_store %arg3[%c1_13, %c0_14], %36 {strides = array<i32>} : memref<2x96xf32, #tpu.memory_space<vmem>>, vector<1x96xf32>,
    %c0_15 = arith.constant 0 : index
    %c0_16 = arith.constant 0 : index
    %38 = vector.load %arg3[%c0_15, %c0_16] : memref<2x96xf32, #tpu.memory_space<vmem>>, vector<2x96xf32>
    %39 = arith.negf %38 : vector<2x96xf32>
    %40 = math.exp %39 : vector<2x96xf32>
    %cst = arith.constant 1.000000e+00 : f32
    %41 = vector.broadcast %cst : f32 to vector<2x96xf32>
    %42 = arith.addf %41, %40 : vector<2x96xf32>
    %43 = arith.divf %41, %42 : vector<2x96xf32>
    %44 = vector.extract_strided_slice %43 {offsets = [0, 0], sizes = [2, 32], strides = [1, 1]} : vector<2x96xf32> to vector<2x32xf32>
    %45 = vector.extract_strided_slice %43 {offsets = [0, 32], sizes = [2, 32], strides = [1, 1]} : vector<2x96xf32> to vector<2x32xf32>
    %cst_17 = arith.constant 2.000000e+00 : f32
    %46 = vector.broadcast %cst_17 : f32 to vector<2x32xf32>
    %47 = arith.mulf %46, %45 : vector<2x32xf32>
    %cst_18 = arith.constant 1.000000e+00 : f32
    %48 = vector.broadcast %cst_18 : f32 to vector<2x32xf32>
    %49 = arith.subf %47, %48 : vector<2x32xf32>
    %50 = vector.extract_strided_slice %43 {offsets = [0, 64], sizes = [2, 32], strides = [1, 1]} : vector<2x96xf32> to vector<2x32xf32>
    %51 = arith.mulf %44, %49 : vector<2x32xf32>
    %52 = math.tanh %51 : vector<2x32xf32>
    %53 = arith.mulf %50, %52 : vector<2x32xf32>
    %c64 = arith.constant 64 : index
    %c0_19 = arith.constant 0 : index
    %54 = vector.load %arg1[%c64, %c0_19] : memref<136x96xf32, #tpu.memory_space<vmem>>, vector<32x96xf32>
    %c128 = arith.constant 128 : index
    %c0_20 = arith.constant 0 : index
    %55 = vector.load %arg1[%c128, %c0_20] : memref<136x96xf32, #tpu.memory_space<vmem>>, vector<1x96xf32>
    %cst_21 = arith.constant dense<0.000000e+00> : vector<2x96xf32>
    %56 = tpu.matmul %53, %54, %cst_21 {dimension_numbers = #tpu.dot_dimension_numbers<[1], [0], [0], [1], [0, 0, 1, 1], [], []>} : vector<2x32xf32>, vector<32x96xf32>, vector<2x96xf32> -> vector<2x96xf32>
    %57 = vector.broadcast %55 : vector<1x96xf32> to vector<2x96xf32>
    %58 = arith.addf %56, %57 : vector<2x96xf32>
    %59 = arith.negf %58 : vector<2x96xf32>
    %60 = math.exp %59 : vector<2x96xf32>
    %cst_22 = arith.constant 1.000000e+00 : f32
    %61 = vector.broadcast %cst_22 : f32 to vector<2x96xf32>
    %62 = arith.addf %61, %60 : vector<2x96xf32>
    %63 = arith.divf %61, %62 : vector<2x96xf32>
    %64 = vector.extract_strided_slice %63 {offsets = [0, 0], sizes = [2, 32], strides = [1, 1]} : vector<2x96xf32> to vector<2x32xf32>
    %65 = vector.extract_strided_slice %63 {offsets = [0, 32], sizes = [2, 32], strides = [1, 1]} : vector<2x96xf32> to vector<2x32xf32>
    %cst_23 = arith.constant 2.000000e+00 : f32
    %66 = vector.broadcast %cst_23 : f32 to vector<2x32xf32>
    %67 = arith.mulf %66, %65 : vector<2x32xf32>
    %cst_24 = arith.constant 1.000000e+00 : f32
    %68 = vector.broadcast %cst_24 : f32 to vector<2x32xf32>
    %69 = arith.subf %67, %68 : vector<2x32xf32>
    %70 = vector.extract_strided_slice %63 {offsets = [0, 64], sizes = [2, 32], strides = [1, 1]} : vector<2x96xf32> to vector<2x32xf32>
    %71 = arith.mulf %64, %69 : vector<2x32xf32>
    %72 = math.tanh %71 : vector<2x32xf32>
    %73 = arith.mulf %70, %72 : vector<2x32xf32>
    %c96 = arith.constant 96 : index
    %c0_25 = arith.constant 0 : index
    %74 = vector.load %arg1[%c96, %c0_25] : memref<136x96xf32, #tpu.memory_space<vmem>>, vector<32x32xf32>
    %c129 = arith.constant 129 : index
    %c0_26 = arith.constant 0 : index
    %75 = vector.load %arg1[%c129, %c0_26] : memref<136x96xf32, #tpu.memory_space<vmem>>, vector<1x32xf32>
    %cst_27 = arith.constant dense<0.000000e+00> : vector<2x32xf32>
    %76 = tpu.matmul %73, %74, %cst_27 {dimension_numbers = #tpu.dot_dimension_numbers<[1], [0], [0], [1], [0, 0, 1, 1], [], []>} : vector<2x32xf32>, vector<32x32xf32>, vector<2x32xf32> -> vector<2x32xf32>
    %77 = vector.broadcast %75 : vector<1x32xf32> to vector<2x32xf32>
    %78 = arith.addf %76, %77 : vector<2x32xf32>
    %cst_28 = arith.constant 0.000000e+00 : f32
    %79 = vector.broadcast %cst_28 : f32 to vector<2x32xf32>
    %80 = arith.maximumf %78, %79 : vector<2x32xf32>
    %c130 = arith.constant 130 : index
    %c0_29 = arith.constant 0 : index
    %81 = vector.load %arg1[%c130, %c0_29] : memref<136x96xf32, #tpu.memory_space<vmem>>, vector<1x32xf32>
    %c131 = arith.constant 131 : index
    %c0_30 = arith.constant 0 : index
    %82 = vector.load %arg1[%c131, %c0_30] : memref<136x96xf32, #tpu.memory_space<vmem>>, vector<1x1xf32>
    %83 = vector.broadcast %81 : vector<1x32xf32> to vector<2x32xf32>
    %84 = arith.mulf %80, %83 : vector<2x32xf32>
    %cst_31 = arith.constant dense<0.000000e+00> : vector<2xf32>
    %85 = vector.multi_reduction <add>, %84, %cst_31 [1] : vector<2x32xf32> to vector<2xf32>
    %86 = vector.shape_cast %85 : vector<2xf32> to vector<2x1xf32>
    %87 = vector.broadcast %82 : vector<1x1xf32> to vector<2x1xf32>
    %88 = arith.addf %86, %87 : vector<2x1xf32>
    %89 = arith.negf %88 : vector<2x1xf32>
    %90 = math.exp %89 : vector<2x1xf32>
    %cst_32 = arith.constant 1.000000e+00 : f32
    %91 = vector.broadcast %cst_32 : f32 to vector<2x1xf32>
    %92 = arith.addf %91, %90 : vector<2x1xf32>
    %93 = arith.divf %91, %92 : vector<2x1xf32>
    %c0_33 = arith.constant 0 : index
    %c0_34 = arith.constant 0 : index
    %94 = vector.load %arg2[%c0_33, %c0_34] : memref<2x1xf32, #tpu.memory_space<vmem>>, vector<2x1xf32>
    tpu.vector_store %arg2[%c0_33, %c0_34], %93 {strides = array<i32>} : memref<2x1xf32, #tpu.memory_space<vmem>>, vector<2x1xf32>,
    return
  }
}

</mosaic_0001>

<llo_original>
// kernel: tpu_custom_call.1
$region0: #{tpu_custom_call.1}
  #allocation0 [shape = 'u32[]', space=smem, size = 0x4, offset = 0x4, fixed_abs, tag = 'smem constant byte address 0x4 - core index']
  #allocation1 [shape = 'u32[72,128]{1,0:T(1,128)}', space=vmem, size = 0x9000, scoped, tag = 'internal scratch']
  #allocation2 [shape = 'f32[2,96]{1,0:T(2,128)}', space=vmem, size = 0x400, scoped, tag = 'scratch operand']
  %s0 = inlined_call_operand.hbm [shape: s32[8], index: 0, kind: input, shape index: {}]
  %s1 = inlined_call_operand.hbm [shape: f32[136,96], index: 1, kind: input, shape index: {}]
  %s2 = inlined_call_operand.vmem [shape: f32[2,1], index: 2, kind: output, shape index: {}]
  %s3 = sld [smem:[#allocation0]]
  $region26: #{tpu_custom_call.1} parent=0
    _
  %s5 = ssub.s32 1, %s3
  %s6 = scalar_select 0, %s5, %s3
  $region1: #{tpu_custom_call.1} parent=0
    #allocation3 [shape = 'u8[512]{0}', space=smem, size = 0x200, scoped, tag = 'input window, operand 0, single buffered']
    #allocation4 [shape = 's32[1]{0}', space=sflag, size = 0x4, scoped, tag = 'scoped memory for tpu_custom_call.1']
    #allocation5 [shape = 's32[1]{0}', space=sflag, size = 0x4, scoped, tag = 'scoped memory for tpu_custom_call.1']
    #allocation6 [shape = 'u8[69632]{0}', space=vmem, size = 0x11000, scoped, tag = 'input window, operand 1, single buffered']
    %7 = vsyncpa [#allocation5], 0
    %8 = vsyncpa [#allocation4], 0
    // Predicated region
    $region2: #{tpu_custom_call.1} parent=1 // pred_check
      _
    $region3: #{tpu_custom_call.1} parent=1 // pred_check_branch
      %10 = sbr.rel (0) target = $region5
    $region4: #{tpu_custom_call.1} parent=1 // pred_region
      %12 = vsyncadd [#allocation5], 0
      %s14 = sshll.u32 %s0, 4
      %s15 = int_to_ptr.hbm [resolvable:$true] %s14
      %17 = dma.hbm_to_smem %s15, 16, [#allocation3], [#allocation5]
    $region5: #{tpu_custom_call.1} parent=1 // pred_fallthru
      _
    // Predicated region
    $region6: #{tpu_custom_call.1} parent=1 // pred_check
      _
    $region7: #{tpu_custom_call.1} parent=1 // pred_check_branch
      %19 = sbr.rel (0) target = $region9
    $region8: #{tpu_custom_call.1} parent=1 // pred_region
      %21 = vsyncadd [#allocation4], 0
      %s22 = sshll.u32 %s1, 4
      %s23 = int_to_ptr.hbm [resolvable:$true] %s22
      %s24 = sshll.u32 [#allocation6], 4
      %s25 = int_to_ptr.vmem [resolvable:$true] %s24
      %30 = dma.hbm_to_vmem [thread:$0]  %s23, 2176, %s25, [#allocation4], 128, 128, 8
    $region9: #{tpu_custom_call.1} parent=1 // pred_fallthru
      _
    // Predicated region
    $region10: #{tpu_custom_call.1} parent=1 // pred_check
      _
    $region11: #{tpu_custom_call.1} parent=1 // pred_check_branch
      %32 = sbr.rel (0) target = $region13
    $region12: #{tpu_custom_call.1} parent=1 // pred_region
      %34 = dma.done [#allocation5], 16
    $region13: #{tpu_custom_call.1} parent=1 // pred_fallthru
      _
    // Predicated region
    $region14: #{tpu_custom_call.1} parent=1 // pred_check
      _
    $region15: #{tpu_custom_call.1} parent=1 // pred_check_branch
      %36 = sbr.rel (0) target = $region17
    $region16: #{tpu_custom_call.1} parent=1 // pred_region
      %38 = dma.done [#allocation4], 2176
    $region17: #{tpu_custom_call.1} parent=1 // pred_fallthru
      _
    %39 = sfence
    %s40 = sld [smem:[#allocation3]]
    %s41 = scalar_lea.vmem [#allocation6], %s40
    %v42 = vld [vmem:[%s41] sm:$0x1]
    %s43 = sld [smem:[#allocation3 + $0x1]]
    %s44 = sadd.s32 %s43, 16
    %s45 = scalar_lea.vmem [#allocation6], %s44
    %v46 = vld [vmem:[%s45] sm:$0x1]
    %v47 = vadd.f32 %v42, %v46
    %s48 = sld [smem:[#allocation3 + $0x2]]
    %s49 = sadd.s32 %s48, 32
    %s50 = scalar_lea.vmem [#allocation6], %s49
    %v51 = vld [vmem:[%s50] sm:$0x1]
    %v52 = vadd.f32 %v47, %v51
    %s53 = sld [smem:[#allocation3 + $0x3]]
    %s54 = sadd.s32 %s53, 48
    %s55 = scalar_lea.vmem [#allocation6], %s54
    %v56 = vld [vmem:[%s55] sm:$0x1]
    %v57 = vadd.f32 %v52, %v56
    %vm58 = vcmask 778240
    %59 = vst.msk [vmem:[#allocation2] sm:$0x1] %vm58, %v57
    %s60 = sld [smem:[#allocation3 + $0x4]]
    %s61 = scalar_lea.vmem [#allocation6], %s60
    %v62 = vld [vmem:[%s61] sm:$0x1]
    %s63 = sld [smem:[#allocation3 + $0x5]]
    %s64 = sadd.s32 %s63, 16
    %s65 = scalar_lea.vmem [#allocation6], %s64
    %v66 = vld [vmem:[%s65] sm:$0x1]
    %v67 = vadd.f32 %v62, %v66
    %s68 = sld [smem:[#allocation3 + $0x6]]
    %s69 = sadd.s32 %s68, 32
    %s70 = scalar_lea.vmem [#allocation6], %s69
    %v71 = vld [vmem:[%s70] sm:$0x1]
    %v72 = vadd.f32 %v67, %v71
    %s73 = sld [smem:[#allocation3 + $0x7]]
    %s74 = sadd.s32 %s73, 48
    %s75 = scalar_lea.vmem [#allocation6], %s74
    %v76 = vld [vmem:[%s75] sm:$0x1]
    %v77 = vadd.f32 %v72, %v76
    %78 = vst.msk [vmem:[#allocation2 + $0x1] sm:$0x1] %vm58, %v77
    %v79 = vld [vmem:[#allocation2] sm:$0x3]
    %v80 = vxor.u32 %v79, 2147483648
    %v81 = vmul.f32 %v80, 1.442695
    %v82 = vpow.pop %v81
    %v83 = vadd.f32 %v82, 1.0
    %v84 = vrcp.pop %v83
    %v85 = vmul.f32 %v83, %v84
    %v86 = vsub.f32 1.0, %v85
    %v87 = vmul.f32 %v84, %v86
    %v88 = vadd.f32 %v84, %v87
    %vm89 = vweird.f32 %v83
    %vm90 = vweird.f32 %v84
    %vm91 = vmor %vm89, %vm90
    %v92 = vsel %vm91, %v84, %v88
    %v93 = vand.u32 2147483647, %v83
    %vm94 = vcmp.eq.f32.partialorder %v93, 8.507059e+37
    %v95 = vand.u32 %v83, 2147483648
    %v96 = vor.u32 1.1754944e-38, %v95
    %v97 = vsel %vm94, %v96, %v92
    %v98 = vmul.f32 1.0, %v97
    %v99 = vmul.f32 %v98, 2.0
    %v100 = vsub.f32 %v99, 1.0
    %102 = vrot.lane.b32.xlu0 %v100, 96
    %v103 = vpop.permute.xlu0 %102
    %v105 = vmul.f32 %v98, %v103
    %v106 = vtanh.pop %v105
    %108 = vrot.lane.b32.xlu0 %v106, 64
    %v109 = vpop.permute.xlu0 %108
    %v111 = vmul.f32 %v98, %v109
    %v112 = vld [vmem:[#allocation6 + $0x40] sm:$0xff]
    %v113 = vld [vmem:[#allocation6 + $0x48] sm:$0xff]
    %v114 = vld [vmem:[#allocation6 + $0x50] sm:$0xff]
    %v115 = vld [vmem:[#allocation6 + $0x58] sm:$0xff]
    %v116 = vld [vmem:[#allocation6 + $0x80] sm:$0x1]
    %v117 = vperm.slane %v116, 0
    %119 = vrot.lane.b32.xlu0 %v111, 64
    %v120 = vpop.permute.xlu0 %119
    %vm121 = vcmask 261120
    %v122 = vsel %vm121, %v120, 0
    %124 = vmatpush.msra.mxu0 0.0
    %125 = vmatpush.msra.mxu0 0.0
    %126 = vmatpush.msra.mxu0 0.0
    %127 = vmatpush.msra.mxu0 0.0
    %128 = vmatpush.msra.mxu0 0.0
    %129 = vmatpush.msra.mxu0 0.0
    %130 = vmatpush.msra.mxu0 0.0
    %131 = vmatpush.msra.mxu0 0.0
    %132 = vmatpush.msra.mxu0 0.0
    %133 = vmatpush.msra.mxu0 0.0
    %134 = vmatpush.msra.mxu0 0.0
    %135 = vmatpush.msra.mxu0 0.0
    %136 = vmatpush.msra.mxu0 %v115
    %137 = vmatpush.msra.mxu0 %v114
    %138 = vmatpush.msra.mxu0 %v113
    %139 = vmatpush.msra.mxu0 %v112
    %140 = vmatmul.f32.gmra.mxu0 %v122
    %v141 = vpop.f32.mrf.mxu0
    %v142 = vadd.f32 %v117, %v141
    %143 = vdwg.mxu0
    %v144 = vxor.u32 %v142, 2147483648
    %v145 = vmul.f32 %v144, 1.442695
    %v146 = vpow.pop %v145
    %v147 = vadd.f32 %v146, 1.0
    %v148 = vrcp.pop %v147
    %v149 = vmul.f32 %v147, %v148
    %v150 = vsub.f32 1.0, %v149
    %v151 = vmul.f32 %v148, %v150
    %v152 = vadd.f32 %v148, %v151
    %vm153 = vweird.f32 %v147
    %vm154 = vweird.f32 %v148
    %vm155 = vmor %vm153, %vm154
    %v156 = vsel %vm155, %v148, %v152
    %v157 = vand.u32 2147483647, %v147
    %vm158 = vcmp.eq.f32.partialorder %v157, 8.507059e+37
    %v159 = vand.u32 %v147, 2147483648
    %v160 = vor.u32 1.1754944e-38, %v159
    %v161 = vsel %vm158, %v160, %v156
    %v162 = vmul.f32 1.0, %v161
    %v163 = vmul.f32 %v162, 2.0
    %v164 = vsub.f32 %v163, 1.0
    %166 = vrot.lane.b32.xlu0 %v164, 96
    %v167 = vpop.permute.xlu0 %166
    %v169 = vmul.f32 %v162, %v167
    %v170 = vtanh.pop %v169
    %172 = vrot.lane.b32.xlu0 %v170, 64
    %v173 = vpop.permute.xlu0 %172
    %v175 = vmul.f32 %v162, %v173
    %v176 = vld [vmem:[#allocation6 + $0x60] sm:$0xff]
    %v177 = vld [vmem:[#allocation6 + $0x68] sm:$0xff]
    %v178 = vld [vmem:[#allocation6 + $0x70] sm:$0xff]
    %v179 = vld [vmem:[#allocation6 + $0x78] sm:$0xff]
    %v180 = vld [vmem:[#allocation6 + $0x81] sm:$0x1]
    %v181 = vperm.slane %v180, 0
    %183 = vrot.lane.b32.xlu0 %v175, 64
    %v184 = vpop.permute.xlu0 %183
    %v185 = vsel %vm121, %v184, 0
    %187 = vmatpush.msra.mxu0 0.0
    %188 = vmatpush.msra.mxu0 0.0
    %189 = vmatpush.msra.mxu0 0.0
    %190 = vmatpush.msra.mxu0 0.0
    %191 = vmatpush.msra.mxu0 0.0
    %192 = vmatpush.msra.mxu0 0.0
    %193 = vmatpush.msra.mxu0 0.0
    %194 = vmatpush.msra.mxu0 0.0
    %195 = vmatpush.msra.mxu0 0.0
    %196 = vmatpush.msra.mxu0 0.0
    %197 = vmatpush.msra.mxu0 0.0
    %198 = vmatpush.msra.mxu0 0.0
    %199 = vmatpush.msra.mxu0 %v179
    %200 = vmatpush.msra.mxu0 %v178
    %201 = vmatpush.msra.mxu0 %v177
    %202 = vmatpush.msra.mxu0 %v176
    %203 = vmatmul.f32.gmra.mxu0 %v185
    %v204 = vpop.f32.mrf.mxu0
    %v205 = vadd.f32 %v181, %v204
    %206 = vdwg.mxu0
    %v207 = vmax.f32 %v205, 0.0
    %v208 = vld [vmem:[#allocation6 + $0x82] sm:$0x1]
    %v209 = vld [vmem:[#allocation6 + $0x83] sm:$0x1]
    %v210 = vperm.slane %v208, 0
    %v211 = vmul.f32 %v207, %v210
    %vm212 = vcmask 254976
    %v213 = vsel %vm212, %v211, 0.0
    %214 = vadd.xlane.f32.xlu0 %v213
    %v215 = vpop.xlane.xlu0 %214
    %v216 = vperm.slane %v209, 0
    %v217 = vadd.f32 %v215, %v216
    %v218 = vxor.u32 %v217, 2147483648
    %v219 = vmul.f32 %v218, 1.442695
    %v220 = vpow.pop %v219
    %v221 = vadd.f32 %v220, 1.0
    %v222 = vrcp.pop %v221
    %v223 = vmul.f32 %v221, %v222
    %v224 = vsub.f32 1.0, %v223
    %v225 = vmul.f32 %v222, %v224
    %v226 = vadd.f32 %v222, %v225
    %vm227 = vweird.f32 %v221
    %vm228 = vweird.f32 %v222
    %vm229 = vmor %vm227, %vm228
    %v230 = vsel %vm229, %v222, %v226
    %v231 = vand.u32 2147483647, %v221
    %vm232 = vcmp.eq.f32.partialorder %v231, 8.507059e+37
    %v233 = vand.u32 %v221, 2147483648
    %v234 = vor.u32 1.1754944e-38, %v233
    %v235 = vsel %vm232, %v234, %v230
    %v236 = vmul.f32 1.0, %v235
    %vm237 = vcmask 1024
    %238 = vst.msk [vmem:[%s2] sm:$0x3] %vm237, %v236
    // Predicated region
    $region18: #{tpu_custom_call.1} parent=1 // pred_check
      _
    $region19: #{tpu_custom_call.1} parent=1 // pred_check_branch
      %240 = sbr.rel (0) target = $region21
    $region20: #{tpu_custom_call.1} parent=1 // pred_region
      _
    $region21: #{tpu_custom_call.1} parent=1 // pred_fallthru
      _
    // Predicated region
    $region22: #{tpu_custom_call.1} parent=1 // pred_check
      _
    $region23: #{tpu_custom_call.1} parent=1 // pred_check_branch
      %242 = sbr.rel (0) target = $region25
    $region24: #{tpu_custom_call.1} parent=1 // pred_region
      _
    $region25: #{tpu_custom_call.1} parent=1 // pred_fallthru
      _
    %243 = vsyncpa [#allocation4], 1
    %244 = vsyncpa [#allocation5], 1

</llo_original>
